<compile_context>
chip_gen: v7x
topology: tpu7x:2x2x1
jax: 0.10.0
libtpu: 0.0.40
codegen_flags: <defaults>
</compile_context>

<pallas_src>
import functools

import jax
import jax.numpy as jnp
from jax.experimental import pallas as pl
from jax.experimental.pallas import tpu as pltpu


def _round_up(x: int, m: int) -> int:
    return (x + m - 1) // m * m


def _fused_mlp_kernel(x_ref, w0_ref, wr_ref, bh_ref, wo_ref, bo_ref, o_ref,
                      *, num_rest):
    """Whole MLP for one batch tile.

    x_ref : (TILE_M, Din_p)  f32   padded input activations (one batch tile)
    w0_ref: (Din_p, Dp)      bf16  first hidden weight (in, out) layout
    wr_ref: (Lr, Dp, Dp)     bf16  remaining hidden weights, stacked
    bh_ref: (L, 1, Dp)       f32   all hidden biases, stacked
    wo_ref: (Dp, Op)         bf16  output weight
    bo_ref: (1, Op)          f32   output bias
    o_ref : (TILE_M, Op)     f32   padded output tile
    """
    act = x_ref[...]                                   # f32

    # First hidden layer (un-inflated K dimension).
    y = jnp.dot(act.astype(jnp.bfloat16), w0_ref[...],
                preferred_element_type=jnp.float32)
    act = jax.nn.sigmoid(y + bh_ref[0])                # f32 (TILE_M, Dp)

    # Remaining hidden layers: static Python loop, unrolled at trace time;
    # activations stay in vregs/VMEM, weights are resident.
    for l in range(num_rest):
        y = jnp.dot(act.astype(jnp.bfloat16), wr_ref[l],
                    preferred_element_type=jnp.float32)
        act = jax.nn.sigmoid(y + bh_ref[l + 1])

    out = jnp.dot(act.astype(jnp.bfloat16), wo_ref[...],
                  preferred_element_type=jnp.float32)
    o_ref[...] = (out + bo_ref[...]).astype(o_ref.dtype)


def init_params(key, input_count, output_count, hidden_layer_count,
                hidden_layer_node_count):
    """Deterministic init mimicking nn.Linear default (uniform +/- 1/sqrt(fan_in)).

    Weights stored as (in_features, out_features), i.e. already transposed.
    """
    params = []
    in_dim = input_count
    dims = [hidden_layer_node_count] * hidden_layer_count + [output_count]
    for out_dim in dims:
        key, kw, kb = jax.random.split(key, 3)
        bound = 1.0 / jnp.sqrt(jnp.float32(in_dim))
        w = jax.random.uniform(kw, (in_dim, out_dim), jnp.float32,
                               minval=-bound, maxval=bound)
        b = jax.random.uniform(kb, (out_dim,), jnp.float32,
                               minval=-bound, maxval=bound)
        params.append((w, b))
        in_dim = out_dim
    return params


def pack_params(params):
    """Pad feature dims to 128, cast weights to bf16, stack hidden layers.

    Returns (w0, wr, bh, wo, bo):
      w0: (Din_p, Dp) bf16   first hidden layer weight
      wr: (max(L-1,1), Dp, Dp) bf16   remaining hidden weights (dummy if L==1)
      bh: (L, 1, Dp)  f32    all hidden biases
      wo: (Dp, Op)    bf16   output weight
      bo: (1, Op)     f32    output bias
    """
    assert len(params) >= 2, "need at least one hidden layer + output head"
    hidden = params[:-1]
    w_out, b_out = params[-1]

    in_dim = hidden[0][0].shape[0]
    hid_dim = hidden[0][0].shape[1]
    out_dim = w_out.shape[1]

    Din_p = _round_up(in_dim, 128)
    Dp = _round_up(hid_dim, 128)
    Op = _round_up(out_dim, 128)

    def pad2(w, r, c):
        return jnp.pad(w, ((0, r - w.shape[0]), (0, c - w.shape[1])))

    w0 = pad2(hidden[0][0], Din_p, Dp).astype(jnp.bfloat16)
    if len(hidden) > 1:
        wr = jnp.stack([pad2(w, Dp, Dp) for w, _ in hidden[1:]]
                       ).astype(jnp.bfloat16)                      # (L-1, Dp, Dp)
    else:
        wr = jnp.zeros((1, Dp, Dp), jnp.bfloat16)                  # unused dummy
    bh = jnp.stack([
        jnp.pad(b.reshape(1, -1), ((0, 0), (0, Dp - b.shape[0])))
        for _, b in hidden
    ]).astype(jnp.float32)                                         # (L, 1, Dp)
    wo = pad2(w_out, Dp, Op).astype(jnp.bfloat16)
    bo = jnp.pad(b_out.reshape(1, -1),
                 ((0, 0), (0, Op - b_out.shape[0]))).astype(jnp.float32)
    return w0, wr, bh, wo, bo


def mlp_forward(x, packed, output_count):
    """Fused MLP forward: pad x, run one Pallas kernel over batch tiles, slice."""
    w0, wr, bh, wo, bo = packed
    B, D_in = x.shape
    Din_p, Dp = w0.shape
    Op = wo.shape[1]
    L = bh.shape[0]                      # number of hidden layers
    num_rest = L - 1                     # hidden layers after the first
    Lr = wr.shape[0]

    # Batch tiling: multiples of 16 (bf16 sublane packing), up to 256 rows/tile.
    TILE_M = min(256, _round_up(B, 16))
    Bp = _round_up(B, TILE_M)
    grid = (Bp // TILE_M,)

    x_p = jnp.pad(x.astype(jnp.float32), ((0, Bp - B), (0, Din_p - D_in)))

    # Advisory cost estimate for the XLA scheduler.
    flops = 2 * Bp * (Din_p * Dp + max(num_rest, 0) * Dp * Dp + Dp * Op)
    transcendentals = Bp * Dp * L
    weight_bytes = ((w0.size + wr.size + wo.size) * 2
                    + (bh.size + bo.size) * 4)
    bytes_accessed = Bp * Din_p * 4 + weight_bytes + Bp * Op * 4
    cost = pl.CostEstimate(flops=flops, transcendentals=transcendentals,
                           bytes_accessed=bytes_accessed)

    # VMEM budget: double-buffered weights + a few activation tiles + headroom,
    # capped at v7x's 64 MiB physical VMEM.
    act_tile_bytes = TILE_M * (Din_p + 2 * Dp + Op) * 4
    vmem_limit = int(min(64 * 1024 * 1024,
                         2 * weight_bytes + 6 * act_tile_bytes + (8 << 20)))

    out_p = pl.pallas_call(
        functools.partial(_fused_mlp_kernel, num_rest=num_rest),
        out_shape=jax.ShapeDtypeStruct((Bp, Op), jnp.float32),
        grid_spec=pltpu.PrefetchScalarGridSpec(
            num_scalar_prefetch=0,
            grid=grid,
            in_specs=[
                # Streaming batch tile of activations.
                pl.BlockSpec((TILE_M, Din_p), lambda i: (i, 0)),
                # Resident weights/biases: constant index_map -> DMA'd once.
                pl.BlockSpec((Din_p, Dp), lambda i: (0, 0)),
                pl.BlockSpec((Lr, Dp, Dp), lambda i: (0, 0, 0)),
                pl.BlockSpec((L, 1, Dp), lambda i: (0, 0, 0)),
                pl.BlockSpec((Dp, Op), lambda i: (0, 0)),
                pl.BlockSpec((1, Op), lambda i: (0, 0)),
            ],
            out_specs=pl.BlockSpec((TILE_M, Op), lambda i: (i, 0)),
        ),
        compiler_params=pltpu.CompilerParams(
            dimension_semantics=("parallel",),
            vmem_limit_bytes=vmem_limit,
        ),
        cost_estimate=cost,
    )(x_p, w0, wr, bh, wo, bo)

    return out_p[:B, :output_count]


def mlp_reference(x, params):
    for w, b in params[:-1]:
        x = jax.nn.sigmoid(x @ w + b)
    w, b = params[-1]
    return x @ w + b


if __name__ == "__main__":
    # Small config consistent with Model(input_count, output_count,
    # hidden_layer_count, hidden_layer_node_count).
    batch = 8
    input_count = 32
    output_count = 16
    hidden_layer_count = 3
    hidden_layer_node_count = 32

    key = jax.random.PRNGKey(0)
    key, kx = jax.random.split(key)
    x = jax.random.normal(kx, (batch, input_count), jnp.float32)

    params = init_params(key, input_count, output_count,
                         hidden_layer_count, hidden_layer_node_count)
    packed = pack_params(params)

    out = mlp_forward(x, packed, output_count)
    out = jax.block_until_ready(out)

    ref = mlp_reference(x, params)
    assert out.shape == (batch, output_count)
    # bf16 weights -> loosened tolerance vs. the f32 reference.
    assert jnp.allclose(out, ref, atol=3e-2, rtol=3e-2), "mismatch vs reference"

    print("KERNEL_OK")
</pallas_src>

<mosaic_0001>
module attributes {stable_mosaic.version = 11 : i64} {
  func.func @_fused_mlp_kernel(%arg0: i32, %arg1: memref<16x128xf32, #tpu.memory_space<vmem>>, %arg2: memref<128x128xbf16, #tpu.memory_space<vmem>>, %arg3: memref<2x128x128xbf16, #tpu.memory_space<vmem>>, %arg4: memref<3x1x128xf32, #tpu.memory_space<vmem>>, %arg5: memref<128x128xbf16, #tpu.memory_space<vmem>>, %arg6: memref<1x128xf32, #tpu.memory_space<vmem>>, %arg7: memref<16x128xf32, #tpu.memory_space<vmem>>) attributes {dimension_semantics = [#tpu.dimension_semantics<parallel>], iteration_bounds = array<i64: 1>, scalar_prefetch = 0 : i64, scratch_operands = 0 : i64, tpu.core_type = #tpu.core_type<tc>, window_params = [{transform_indices = @transform_0, window_bounds = array<i64: 16, 128>}, {pipeline_mode = #tpu.pipeline_mode<synchronous>, transform_indices = @transform_1, window_bounds = array<i64: 128, 128>}, {pipeline_mode = #tpu.pipeline_mode<synchronous>, transform_indices = @transform_2, window_bounds = array<i64: 2, 128, 128>}, {pipeline_mode = #tpu.pipeline_mode<synchronous>, transform_indices = @transform_3, window_bounds = array<i64: 3, 1, 128>}, {pipeline_mode = #tpu.pipeline_mode<synchronous>, transform_indices = @transform_4, window_bounds = array<i64: 128, 128>}, {pipeline_mode = #tpu.pipeline_mode<synchronous>, transform_indices = @transform_5, window_bounds = array<i64: 1, 128>}, {transform_indices = @transform_6, window_bounds = array<i64: 16, 128>}]} {
    %c0 = arith.constant 0 : index
    %c0_0 = arith.constant 0 : index
    %0 = vector.load %arg1[%c0, %c0_0] : memref<16x128xf32, #tpu.memory_space<vmem>>, vector<16x128xf32>
    %1 = arith.truncf %0 : vector<16x128xf32> to vector<16x128xbf16>
    %c0_1 = arith.constant 0 : index
    %c0_2 = arith.constant 0 : index
    %2 = vector.load %arg2[%c0_1, %c0_2] : memref<128x128xbf16, #tpu.memory_space<vmem>>, vector<128x128xbf16>
    %cst = arith.constant dense<0.000000e+00> : vector<16x128xf32>
    %3 = tpu.matmul %1, %2, %cst {dimension_numbers = #tpu.dot_dimension_numbers<[1], [0], [0], [1], [0, 0, 1, 1], [], []>} : vector<16x128xbf16>, vector<128x128xbf16>, vector<16x128xf32> -> vector<16x128xf32>
    %c0_3 = arith.constant 0 : index
    %c0_4 = arith.constant 0 : index
    %c0_5 = arith.constant 0 : index
    %4 = vector.load %arg4[%c0_3, %c0_4, %c0_5] : memref<3x1x128xf32, #tpu.memory_space<vmem>>, vector<1x1x128xf32>
    %5 = vector.shape_cast %4 : vector<1x1x128xf32> to vector<1x128xf32>
    %6 = vector.broadcast %5 : vector<1x128xf32> to vector<16x128xf32>
    %7 = arith.addf %3, %6 : vector<16x128xf32>
    %8 = arith.negf %7 : vector<16x128xf32>
    %9 = math.exp %8 : vector<16x128xf32>
    %cst_6 = arith.constant 1.000000e+00 : f32
    %10 = vector.broadcast %cst_6 : f32 to vector<16x128xf32>
    %11 = arith.addf %10, %9 : vector<16x128xf32>
    %12 = arith.divf %10, %11 : vector<16x128xf32>
    %13 = arith.truncf %12 : vector<16x128xf32> to vector<16x128xbf16>
    %c0_7 = arith.constant 0 : index
    %c0_8 = arith.constant 0 : index
    %c0_9 = arith.constant 0 : index
    %14 = vector.load %arg3[%c0_7, %c0_8, %c0_9] : memref<2x128x128xbf16, #tpu.memory_space<vmem>>, vector<1x128x128xbf16>
    %15 = vector.shape_cast %14 : vector<1x128x128xbf16> to vector<128x128xbf16>
    %cst_10 = arith.constant dense<0.000000e+00> : vector<16x128xf32>
    %16 = tpu.matmul %13, %15, %cst_10 {dimension_numbers = #tpu.dot_dimension_numbers<[1], [0], [0], [1], [0, 0, 1, 1], [], []>} : vector<16x128xbf16>, vector<128x128xbf16>, vector<16x128xf32> -> vector<16x128xf32>
    %c1 = arith.constant 1 : index
    %c0_11 = arith.constant 0 : index
    %c0_12 = arith.constant 0 : index
    %17 = vector.load %arg4[%c1, %c0_11, %c0_12] : memref<3x1x128xf32, #tpu.memory_space<vmem>>, vector<1x1x128xf32>
    %18 = vector.shape_cast %17 : vector<1x1x128xf32> to vector<1x128xf32>
    %19 = vector.broadcast %18 : vector<1x128xf32> to vector<16x128xf32>
    %20 = arith.addf %16, %19 : vector<16x128xf32>
    %21 = arith.negf %20 : vector<16x128xf32>
    %22 = math.exp %21 : vector<16x128xf32>
    %cst_13 = arith.constant 1.000000e+00 : f32
    %23 = vector.broadcast %cst_13 : f32 to vector<16x128xf32>
    %24 = arith.addf %23, %22 : vector<16x128xf32>
    %25 = arith.divf %23, %24 : vector<16x128xf32>
    %26 = arith.truncf %25 : vector<16x128xf32> to vector<16x128xbf16>
    %c1_14 = arith.constant 1 : index
    %c0_15 = arith.constant 0 : index
    %c0_16 = arith.constant 0 : index
    %27 = vector.load %arg3[%c1_14, %c0_15, %c0_16] : memref<2x128x128xbf16, #tpu.memory_space<vmem>>, vector<1x128x128xbf16>
    %28 = vector.shape_cast %27 : vector<1x128x128xbf16> to vector<128x128xbf16>
    %cst_17 = arith.constant dense<0.000000e+00> : vector<16x128xf32>
    %29 = tpu.matmul %26, %28, %cst_17 {dimension_numbers = #tpu.dot_dimension_numbers<[1], [0], [0], [1], [0, 0, 1, 1], [], []>} : vector<16x128xbf16>, vector<128x128xbf16>, vector<16x128xf32> -> vector<16x128xf32>
    %c2 = arith.constant 2 : index
    %c0_18 = arith.constant 0 : index
    %c0_19 = arith.constant 0 : index
    %30 = vector.load %arg4[%c2, %c0_18, %c0_19] : memref<3x1x128xf32, #tpu.memory_space<vmem>>, vector<1x1x128xf32>
    %31 = vector.shape_cast %30 : vector<1x1x128xf32> to vector<1x128xf32>
    %32 = vector.broadcast %31 : vector<1x128xf32> to vector<16x128xf32>
    %33 = arith.addf %29, %32 : vector<16x128xf32>
    %34 = arith.negf %33 : vector<16x128xf32>
    %35 = math.exp %34 : vector<16x128xf32>
    %cst_20 = arith.constant 1.000000e+00 : f32
    %36 = vector.broadcast %cst_20 : f32 to vector<16x128xf32>
    %37 = arith.addf %36, %35 : vector<16x128xf32>
    %38 = arith.divf %36, %37 : vector<16x128xf32>
    %39 = arith.truncf %38 : vector<16x128xf32> to vector<16x128xbf16>
    %c0_21 = arith.constant 0 : index
    %c0_22 = arith.constant 0 : index
    %40 = vector.load %arg5[%c0_21, %c0_22] : memref<128x128xbf16, #tpu.memory_space<vmem>>, vector<128x128xbf16>
    %cst_23 = arith.constant dense<0.000000e+00> : vector<16x128xf32>
    %41 = tpu.matmul %39, %40, %cst_23 {dimension_numbers = #tpu.dot_dimension_numbers<[1], [0], [0], [1], [0, 0, 1, 1], [], []>} : vector<16x128xbf16>, vector<128x128xbf16>, vector<16x128xf32> -> vector<16x128xf32>
    %c0_24 = arith.constant 0 : index
    %c0_25 = arith.constant 0 : index
    %42 = vector.load %arg6[%c0_24, %c0_25] : memref<1x128xf32, #tpu.memory_space<vmem>>, vector<1x128xf32>
    %43 = vector.broadcast %42 : vector<1x128xf32> to vector<16x128xf32>
    %44 = arith.addf %41, %43 : vector<16x128xf32>
    %c0_26 = arith.constant 0 : index
    %c0_27 = arith.constant 0 : index
    %45 = vector.load %arg7[%c0_26, %c0_27] : memref<16x128xf32, #tpu.memory_space<vmem>>, vector<16x128xf32>
    tpu.vector_store %arg7[%c0_26, %c0_27], %44 {strides = array<i32>} : memref<16x128xf32, #tpu.memory_space<vmem>>, vector<16x128xf32>,
    return
  }
  func.func @transform_0(%arg0: i32) -> (i32, i32) {
    %c0_i32 = arith.constant 0 : i32
    %c0_i32_0 = arith.constant 0 : i32
    return %arg0, %c0_i32 : i32, i32
  }
  func.func @transform_1(%arg0: i32) -> (i32, i32) {
    %c0_i32 = arith.constant 0 : i32
    %c0_i32_0 = arith.constant 0 : i32
    %c0_i32_1 = arith.constant 0 : i32
    return %c0_i32, %c0_i32_0 : i32, i32
  }
  func.func @transform_2(%arg0: i32) -> (i32, i32, i32) {
    %c0_i32 = arith.constant 0 : i32
    %c0_i32_0 = arith.constant 0 : i32
    %c0_i32_1 = arith.constant 0 : i32
    %c0_i32_2 = arith.constant 0 : i32
    return %c0_i32, %c0_i32_0, %c0_i32_1 : i32, i32, i32
  }
  func.func @transform_3(%arg0: i32) -> (i32, i32, i32) {
    %c0_i32 = arith.constant 0 : i32
    %c0_i32_0 = arith.constant 0 : i32
    %c0_i32_1 = arith.constant 0 : i32
    %c0_i32_2 = arith.constant 0 : i32
    return %c0_i32, %c0_i32_0, %c0_i32_1 : i32, i32, i32
  }
  func.func @transform_4(%arg0: i32) -> (i32, i32) {
    %c0_i32 = arith.constant 0 : i32
    %c0_i32_0 = arith.constant 0 : i32
    %c0_i32_1 = arith.constant 0 : i32
    return %c0_i32, %c0_i32_0 : i32, i32
  }
  func.func @transform_5(%arg0: i32) -> (i32, i32) {
    %c0_i32 = arith.constant 0 : i32
    %c0_i32_0 = arith.constant 0 : i32
    %c0_i32_1 = arith.constant 0 : i32
    return %c0_i32, %c0_i32_0 : i32, i32
  }
  func.func @transform_6(%arg0: i32) -> (i32, i32) {
    %c0_i32 = arith.constant 0 : i32
    %c0_i32_0 = arith.constant 0 : i32
    return %arg0, %c0_i32 : i32, i32
  }
}

</mosaic_0001>

<llo_original>
// kernel: tpu_custom_call.1
$region0: #{tpu_custom_call.1}
  #allocation0 [shape = 'u32[]', space=smem, size = 0x4, offset = 0x4, fixed_abs, tag = 'smem constant byte address 0x4 - core index']
  #allocation1 [shape = 'u32[144,128]{1,0:T(1,128)}', space=vmem, size = 0x12000, scoped, tag = 'internal scratch']
  %s0 = inlined_call_operand.hbm [shape: f32[16,128], index: 0, kind: input, shape index: {}]
  %s1 = inlined_call_operand.hbm [shape: bf16[128,128], index: 1, kind: input, shape index: {}]
  %s2 = inlined_call_operand.hbm [shape: bf16[2,128,128], index: 2, kind: input, shape index: {}]
  %s3 = inlined_call_operand.vmem [shape: f32[3,1,128], index: 3, kind: input, shape index: {}]
  %s4 = inlined_call_operand.hbm [shape: bf16[128,128], index: 4, kind: input, shape index: {}]
  %s5 = inlined_call_operand.vmem [shape: f32[1,128], index: 5, kind: input, shape index: {}]
  %s6 = inlined_call_operand.hbm [shape: f32[16,128], index: 6, kind: output, shape index: {}]
  %s7 = sld [smem:[#allocation0]]
  $region50: #{tpu_custom_call.1} parent=0
    _
  %s9 = ssub.s32 1, %s7
  %s10 = scalar_select 0, %s9, %s7
  $region1: #{tpu_custom_call.1} parent=0
    #allocation2 [shape = 'u8[8192]{0}', space=vmem, size = 0x2000, scoped, tag = 'input window, operand 0, single buffered']
    #allocation3 [shape = 's32[1]{0}', space=sflag, size = 0x4, scoped, tag = 'scoped memory for tpu_custom_call.1']
    #allocation4 [shape = 's32[1]{0}', space=sflag, size = 0x4, scoped, tag = 'scoped memory for tpu_custom_call.1']
    #allocation5 [shape = 'u8[32768]{0}', space=vmem, size = 0x8000, scoped, tag = 'input window, operand 1, single buffered']
    #allocation6 [shape = 's32[1]{0}', space=sflag, size = 0x4, scoped, tag = 'scoped memory for tpu_custom_call.1']
    #allocation7 [shape = 'u8[65536]{0}', space=vmem, size = 0x10000, scoped, tag = 'input window, operand 2, single buffered']
    #allocation8 [shape = 'u8[32768]{0}', space=vmem, size = 0x8000, scoped, tag = 'input window, operand 4, single buffered']
    #allocation9 [shape = 's32[1]{0}', space=sflag, size = 0x4, scoped, tag = 'scoped memory for tpu_custom_call.1']
    #allocation10 [shape = 'u8[8192]{0}', space=vmem, size = 0x2000, scoped, tag = 'output window, operand 0, single buffered']
    %11 = vsyncpa [#allocation3], 0
    %12 = vsyncpa [#allocation6], 0
    %13 = vsyncpa [#allocation9], 0
    %14 = vsyncpa [#allocation4], 0
    // Predicated region
    $region2: #{tpu_custom_call.1} parent=1 // pred_check
      _
    $region3: #{tpu_custom_call.1} parent=1 // pred_check_branch
      %16 = sbr.rel (0) target = $region5
    $region4: #{tpu_custom_call.1} parent=1 // pred_region
      %s18 = ssub.s32 256, 256
      %19 = vsyncadd [#allocation3], %s18
      %s20 = sshll.u32 [#allocation2], 4
      %s21 = int_to_ptr.vmem [resolvable:$true] %s20
      %26 = dma.hbm_to_vmem [thread:$0]  %s0, 256, %s21, [#allocation3], 128, 128, 8
    $region5: #{tpu_custom_call.1} parent=1 // pred_fallthru
      _
    // Predicated region
    $region6: #{tpu_custom_call.1} parent=1 // pred_check
      _
    $region7: #{tpu_custom_call.1} parent=1 // pred_check_branch
      %28 = sbr.rel (0) target = $region9
    $region8: #{tpu_custom_call.1} parent=1 // pred_region
      %s30 = ssub.s32 1024, 1024
      %31 = vsyncadd [#allocation6], %s30
      %s32 = sshll.u32 [#allocation5], 4
      %s33 = int_to_ptr.vmem [resolvable:$true] %s32
      %38 = dma.hbm_to_vmem [thread:$0]  %s1, 1024, %s33, [#allocation6], 64, 64, 4
    $region9: #{tpu_custom_call.1} parent=1 // pred_fallthru
      _
    // Predicated region
    $region10: #{tpu_custom_call.1} parent=1 // pred_check
      _
    $region11: #{tpu_custom_call.1} parent=1 // pred_check_branch
      %40 = sbr.rel (0) target = $region13
    $region12: #{tpu_custom_call.1} parent=1 // pred_region
      %s42 = ssub.s32 2048, 2048
      %43 = vsyncadd [#allocation6], %s42
      %s44 = sshll.u32 [#allocation7], 4
      %s45 = int_to_ptr.vmem [resolvable:$true] %s44
      %50 = dma.hbm_to_vmem [thread:$0]  %s2, 2048, %s45, [#allocation6], 64, 64, 4
    $region13: #{tpu_custom_call.1} parent=1 // pred_fallthru
      _
    // Predicated region
    $region14: #{tpu_custom_call.1} parent=1 // pred_check
      _
    $region15: #{tpu_custom_call.1} parent=1 // pred_check_branch
      %52 = sbr.rel (0) target = $region17
    $region16: #{tpu_custom_call.1} parent=1 // pred_region
      _
    $region17: #{tpu_custom_call.1} parent=1 // pred_fallthru
      _
    // Predicated region
    $region18: #{tpu_custom_call.1} parent=1 // pred_check
      _
    $region19: #{tpu_custom_call.1} parent=1 // pred_check_branch
      %54 = sbr.rel (0) target = $region21
    $region20: #{tpu_custom_call.1} parent=1 // pred_region
      %s56 = ssub.s32 1024, 1024
      %57 = vsyncadd [#allocation9], %s56
      %s58 = sshll.u32 [#allocation8], 4
      %s59 = int_to_ptr.vmem [resolvable:$true] %s58
      %64 = dma.hbm_to_vmem [thread:$0]  %s4, 1024, %s59, [#allocation9], 64, 64, 4
    $region21: #{tpu_custom_call.1} parent=1 // pred_fallthru
      _
    // Predicated region
    $region22: #{tpu_custom_call.1} parent=1 // pred_check
      _
    $region23: #{tpu_custom_call.1} parent=1 // pred_check_branch
      %66 = sbr.rel (0) target = $region25
    $region24: #{tpu_custom_call.1} parent=1 // pred_region
      _
    $region25: #{tpu_custom_call.1} parent=1 // pred_fallthru
      _
    // Predicated region
    $region26: #{tpu_custom_call.1} parent=1 // pred_check
      _
    $region27: #{tpu_custom_call.1} parent=1 // pred_check_branch
      %68 = sbr.rel (0) target = $region29
    $region28: #{tpu_custom_call.1} parent=1 // pred_region
      %69 = dma.done [#allocation3], 256
    $region29: #{tpu_custom_call.1} parent=1 // pred_fallthru
      _
    // Predicated region
    $region30: #{tpu_custom_call.1} parent=1 // pred_check
      _
    $region31: #{tpu_custom_call.1} parent=1 // pred_check_branch
      %71 = sbr.rel (0) target = $region33
    $region32: #{tpu_custom_call.1} parent=1 // pred_region
      %72 = dma.done [#allocation6], 1024
    $region33: #{tpu_custom_call.1} parent=1 // pred_fallthru
      _
    // Predicated region
    $region34: #{tpu_custom_call.1} parent=1 // pred_check
      _
    $region35: #{tpu_custom_call.1} parent=1 // pred_check_branch
      %74 = sbr.rel (0) target = $region37
    $region36: #{tpu_custom_call.1} parent=1 // pred_region
      %75 = dma.done [#allocation6], 2048
    $region37: #{tpu_custom_call.1} parent=1 // pred_fallthru
      _
    // Predicated region
    $region38: #{tpu_custom_call.1} parent=1 // pred_check
      _
    $region39: #{tpu_custom_call.1} parent=1 // pred_check_branch
      %77 = sbr.rel (0) target = $region41
    $region40: #{tpu_custom_call.1} parent=1 // pred_region
      %78 = dma.done [#allocation9], 1024
    $region41: #{tpu_custom_call.1} parent=1 // pred_fallthru
      _
    %v80 = vld [vmem:[#allocation2] sm:$0xff]
    %v81 = vld [vmem:[#allocation2 + $0x8] sm:$0xff]
    %v82 = vpack.c.bf16 %v81, %v80
    %v83 = vld [vmem:[#allocation5] sm:$0xf]
    %v84 = vld [vmem:[#allocation5 + $0x4] sm:$0xf]
    %v85 = vld [vmem:[#allocation5 + $0x8] sm:$0xf]
    %v86 = vld [vmem:[#allocation5 + $0xc] sm:$0xf]
    %v87 = vld [vmem:[#allocation5 + $0x10] sm:$0xf]
    %v88 = vld [vmem:[#allocation5 + $0x14] sm:$0xf]
    %v89 = vld [vmem:[#allocation5 + $0x18] sm:$0xf]
    %v90 = vld [vmem:[#allocation5 + $0x1c] sm:$0xf]
    %v91 = vld [vmem:[#allocation5 + $0x20] sm:$0xf]
    %v92 = vld [vmem:[#allocation5 + $0x24] sm:$0xf]
    %v93 = vld [vmem:[#allocation5 + $0x28] sm:$0xf]
    %v94 = vld [vmem:[#allocation5 + $0x2c] sm:$0xf]
    %v95 = vld [vmem:[#allocation5 + $0x30] sm:$0xf]
    %v96 = vld [vmem:[#allocation5 + $0x34] sm:$0xf]
    %v97 = vld [vmem:[#allocation5 + $0x38] sm:$0xf]
    %v98 = vld [vmem:[#allocation5 + $0x3c] sm:$0xf]
    %v99 = vld [vmem:[%s3] sm:$0x1]
    %v101 = vlaneseq
    %v102 = vshrl.u32 %v101, 7
    %v103 = vsub.s32 0, %v102
    %v104 = vrot.slane %v99, %v103
    %v122 = vunpack.c.l.b16 %v83
    %v123 = vunpack.c.l.b16 %v84
    %v124 = vunpack.c.l.b16 %v85
    %v125 = vunpack.c.l.b16 %v86
    %v126 = vunpack.c.l.b16 %v87
    %v127 = vunpack.c.l.b16 %v88
    %v128 = vunpack.c.l.b16 %v89
    %v129 = vunpack.c.l.b16 %v90
    %v130 = vunpack.c.l.b16 %v91
    %v131 = vunpack.c.l.b16 %v92
    %v132 = vunpack.c.l.b16 %v93
    %v133 = vunpack.c.l.b16 %v94
    %v134 = vunpack.c.l.b16 %v95
    %v135 = vunpack.c.l.b16 %v96
    %v136 = vunpack.c.l.b16 %v97
    %v137 = vunpack.c.l.b16 %v98
    %v138 = vpack.c.b16 %v123, %v122
    %v139 = vpack.c.b16 %v125, %v124
    %v140 = vpack.c.b16 %v127, %v126
    %v141 = vpack.c.b16 %v129, %v128
    %v142 = vpack.c.b16 %v131, %v130
    %v143 = vpack.c.b16 %v133, %v132
    %v144 = vpack.c.b16 %v135, %v134
    %v145 = vpack.c.b16 %v137, %v136
    %154 = vmatprep.subr.bf16.mxu0 0
    %155 = vmatpush1.bf16.msra.mxu0 %v138
    %156 = vmatprep.subr.bf16.mxu0 0
    %157 = vmatpush1.bf16.msra.mxu0 %v139
    %158 = vmatprep.subr.bf16.mxu0 0
    %159 = vmatpush1.bf16.msra.mxu0 %v140
    %160 = vmatprep.subr.bf16.mxu0 0
    %161 = vmatpush1.bf16.msra.mxu0 %v141
    %162 = vmatprep.subr.bf16.mxu0 0
    %163 = vmatpush1.bf16.msra.mxu0 %v142
    %164 = vmatprep.subr.bf16.mxu0 0
    %165 = vmatpush1.bf16.msra.mxu0 %v143
    %166 = vmatprep.subr.bf16.mxu0 0
    %167 = vmatpush1.bf16.msra.mxu0 %v144
    %168 = vmatprep.subr.bf16.mxu0 0
    %169 = vmatpush1.bf16.msra.mxu0 %v145
    %170 = vmatprep.subr.bf16.mxu0 0
    %171 = vmatpush1.bf16.msra.mxu0 0
    %172 = vmatprep.subr.bf16.mxu0 0
    %173 = vmatpush1.bf16.msra.mxu0 0
    %174 = vmatprep.subr.bf16.mxu0 0
    %175 = vmatpush1.bf16.msra.mxu0 0
    %176 = vmatprep.subr.bf16.mxu0 0
    %177 = vmatpush1.bf16.msra.mxu0 0
    %178 = vmatprep.subr.bf16.mxu0 0
    %179 = vmatpush1.bf16.msra.mxu0 0
    %180 = vmatprep.subr.bf16.mxu0 0
    %181 = vmatpush1.bf16.msra.mxu0 0
    %182 = vmatprep.subr.bf16.mxu0 0
    %183 = vmatpush1.bf16.msra.mxu0 0
    %184 = vmatprep.subr.bf16.mxu0 0
    %185 = vmatpush1.bf16.msra.mxu0 0
    %186 = vmatprep.mubr.bf16.mxu0 0
    %187 = vmatmul.mubr.bf16.gmra.mrb[0].mxu0 %v82
    %v188 = vpop.f32.mrb[0].mxu0
    %v189 = vadd.f32 %v104, %v188
    %v190 = vpop.f32.mrb[0].mxu0
    %v191 = vpop.f32.mrb[0].mxu0
    %v192 = vadd.f32 %v104, %v191
    %v193 = vpop.f32.mrb[0].mxu0
    %194 = vdwg.mxu0
    %v195 = vxor.u32 %v189, 2147483648
    %v196 = vxor.u32 %v192, 2147483648
    %v197 = vmul.f32 %v195, 1.442695
    %v198 = vpow.pop %v197
    %v199 = vmul.f32 %v196, 1.442695
    %v200 = vpow.pop %v199
    %v201 = vadd.f32 %v198, 1.0
    %v202 = vadd.f32 %v200, 1.0
    %v203 = vrcp.pop %v201
    %v204 = vmul.f32 1.0, %v203
    %v205 = vrcp.pop %v202
    %v206 = vmul.f32 1.0, %v205
    %v207 = vpack.c.bf16 %v206, %v204
    %v208 = vld [vmem:[#allocation7] sm:$0xf]
    %v209 = vld [vmem:[#allocation7 + $0x4] sm:$0xf]
    %v210 = vld [vmem:[#allocation7 + $0x8] sm:$0xf]
    %v211 = vld [vmem:[#allocation7 + $0xc] sm:$0xf]
    %v212 = vld [vmem:[#allocation7 + $0x10] sm:$0xf]
    %v213 = vld [vmem:[#allocation7 + $0x14] sm:$0xf]
    %v214 = vld [vmem:[#allocation7 + $0x18] sm:$0xf]
    %v215 = vld [vmem:[#allocation7 + $0x1c] sm:$0xf]
    %v216 = vld [vmem:[#allocation7 + $0x20] sm:$0xf]
    %v217 = vld [vmem:[#allocation7 + $0x24] sm:$0xf]
    %v218 = vld [vmem:[#allocation7 + $0x28] sm:$0xf]
    %v219 = vld [vmem:[#allocation7 + $0x2c] sm:$0xf]
    %v220 = vld [vmem:[#allocation7 + $0x30] sm:$0xf]
    %v221 = vld [vmem:[#allocation7 + $0x34] sm:$0xf]
    %v222 = vld [vmem:[#allocation7 + $0x38] sm:$0xf]
    %v223 = vld [vmem:[#allocation7 + $0x3c] sm:$0xf]
    %s224 = scalar_lea.vmem %s3, 1
    %v225 = vld [vmem:[%s224] sm:$0x1]
    %v227 = vlaneseq
    %v228 = vshrl.u32 %v227, 7
    %v229 = vsub.s32 0, %v228
    %v230 = vrot.slane %v225, %v229
    %v248 = vunpack.c.l.b16 %v208
    %v249 = vunpack.c.l.b16 %v209
    %v250 = vunpack.c.l.b16 %v210
    %v251 = vunpack.c.l.b16 %v211
    %v252 = vunpack.c.l.b16 %v212
    %v253 = vunpack.c.l.b16 %v213
    %v254 = vunpack.c.l.b16 %v214
    %v255 = vunpack.c.l.b16 %v215
    %v256 = vunpack.c.l.b16 %v216
    %v257 = vunpack.c.l.b16 %v217
    %v258 = vunpack.c.l.b16 %v218
    %v259 = vunpack.c.l.b16 %v219
    %v260 = vunpack.c.l.b16 %v220
    %v261 = vunpack.c.l.b16 %v221
    %v262 = vunpack.c.l.b16 %v222
    %v263 = vunpack.c.l.b16 %v223
    %v264 = vpack.c.b16 %v249, %v248
    %v265 = vpack.c.b16 %v251, %v250
    %v266 = vpack.c.b16 %v253, %v252
    %v267 = vpack.c.b16 %v255, %v254
    %v268 = vpack.c.b16 %v257, %v256
    %v269 = vpack.c.b16 %v259, %v258
    %v270 = vpack.c.b16 %v261, %v260
    %v271 = vpack.c.b16 %v263, %v262
    %280 = vmatprep.subr.bf16.mxu0 0
    %281 = vmatpush1.bf16.msra.mxu0 %v264
    %282 = vmatprep.subr.bf16.mxu0 0
    %283 = vmatpush1.bf16.msra.mxu0 %v265
    %284 = vmatprep.subr.bf16.mxu0 0
    %285 = vmatpush1.bf16.msra.mxu0 %v266
    %286 = vmatprep.subr.bf16.mxu0 0
    %287 = vmatpush1.bf16.msra.mxu0 %v267
    %288 = vmatprep.subr.bf16.mxu0 0
    %289 = vmatpush1.bf16.msra.mxu0 %v268
    %290 = vmatprep.subr.bf16.mxu0 0
    %291 = vmatpush1.bf16.msra.mxu0 %v269
    %292 = vmatprep.subr.bf16.mxu0 0
    %293 = vmatpush1.bf16.msra.mxu0 %v270
    %294 = vmatprep.subr.bf16.mxu0 0
    %295 = vmatpush1.bf16.msra.mxu0 %v271
    %296 = vmatprep.subr.bf16.mxu0 0
    %297 = vmatpush1.bf16.msra.mxu0 0
    %298 = vmatprep.subr.bf16.mxu0 0
    %299 = vmatpush1.bf16.msra.mxu0 0
    %300 = vmatprep.subr.bf16.mxu0 0
    %301 = vmatpush1.bf16.msra.mxu0 0
    %302 = vmatprep.subr.bf16.mxu0 0
    %303 = vmatpush1.bf16.msra.mxu0 0
    %304 = vmatprep.subr.bf16.mxu0 0
    %305 = vmatpush1.bf16.msra.mxu0 0
    %306 = vmatprep.subr.bf16.mxu0 0
    %307 = vmatpush1.bf16.msra.mxu0 0
    %308 = vmatprep.subr.bf16.mxu0 0
    %309 = vmatpush1.bf16.msra.mxu0 0
    %310 = vmatprep.subr.bf16.mxu0 0
    %311 = vmatpush1.bf16.msra.mxu0 0
    %312 = vmatprep.mubr.bf16.mxu0 0
    %313 = vmatmul.mubr.bf16.gmra.mrb[0].mxu0 %v207
    %v314 = vpop.f32.mrb[0].mxu0
    %v315 = vadd.f32 %v230, %v314
    %v316 = vpop.f32.mrb[0].mxu0
    %v317 = vpop.f32.mrb[0].mxu0
    %v318 = vadd.f32 %v230, %v317
    %v319 = vpop.f32.mrb[0].mxu0
    %320 = vdwg.mxu0
    %v321 = vxor.u32 %v315, 2147483648
    %v322 = vxor.u32 %v318, 2147483648
    %v323 = vmul.f32 %v321, 1.442695
    %v324 = vpow.pop %v323
    %v325 = vmul.f32 %v322, 1.442695
    %v326 = vpow.pop %v325
    %v327 = vadd.f32 %v324, 1.0
    %v328 = vadd.f32 %v326, 1.0
    %v329 = vrcp.pop %v327
    %v330 = vmul.f32 1.0, %v329
    %v331 = vrcp.pop %v328
    %v332 = vmul.f32 1.0, %v331
    %v333 = vpack.c.bf16 %v332, %v330
    %s334 = scalar_lea.vmem [#allocation7], 64
    %v335 = vld [vmem:[%s334] sm:$0xf]
    %v336 = vld [vmem:[%s334 + $0x4] sm:$0xf]
    %v337 = vld [vmem:[%s334 + $0x8] sm:$0xf]
    %v338 = vld [vmem:[%s334 + $0xc] sm:$0xf]
    %v339 = vld [vmem:[%s334 + $0x10] sm:$0xf]
    %v340 = vld [vmem:[%s334 + $0x14] sm:$0xf]
    %v341 = vld [vmem:[%s334 + $0x18] sm:$0xf]
    %v342 = vld [vmem:[%s334 + $0x1c] sm:$0xf]
    %v343 = vld [vmem:[%s334 + $0x20] sm:$0xf]
    %v344 = vld [vmem:[%s334 + $0x24] sm:$0xf]
    %v345 = vld [vmem:[%s334 + $0x28] sm:$0xf]
    %v346 = vld [vmem:[%s334 + $0x2c] sm:$0xf]
    %v347 = vld [vmem:[%s334 + $0x30] sm:$0xf]
    %v348 = vld [vmem:[%s334 + $0x34] sm:$0xf]
    %v349 = vld [vmem:[%s334 + $0x38] sm:$0xf]
    %v350 = vld [vmem:[%s334 + $0x3c] sm:$0xf]
    %s351 = scalar_lea.vmem %s3, 2
    %v352 = vld [vmem:[%s351] sm:$0x1]
    %v354 = vlaneseq
    %v355 = vshrl.u32 %v354, 7
    %v356 = vsub.s32 0, %v355
    %v357 = vrot.slane %v352, %v356
    %v375 = vunpack.c.l.b16 %v335
    %v376 = vunpack.c.l.b16 %v336
    %v377 = vunpack.c.l.b16 %v337
    %v378 = vunpack.c.l.b16 %v338
    %v379 = vunpack.c.l.b16 %v339
    %v380 = vunpack.c.l.b16 %v340
    %v381 = vunpack.c.l.b16 %v341
    %v382 = vunpack.c.l.b16 %v342
    %v383 = vunpack.c.l.b16 %v343
    %v384 = vunpack.c.l.b16 %v344
    %v385 = vunpack.c.l.b16 %v345
    %v386 = vunpack.c.l.b16 %v346
    %v387 = vunpack.c.l.b16 %v347
    %v388 = vunpack.c.l.b16 %v348
    %v389 = vunpack.c.l.b16 %v349
    %v390 = vunpack.c.l.b16 %v350
    %v391 = vpack.c.b16 %v376, %v375
    %v392 = vpack.c.b16 %v378, %v377
    %v393 = vpack.c.b16 %v380, %v379
    %v394 = vpack.c.b16 %v382, %v381
    %v395 = vpack.c.b16 %v384, %v383
    %v396 = vpack.c.b16 %v386, %v385
    %v397 = vpack.c.b16 %v388, %v387
    %v398 = vpack.c.b16 %v390, %v389
    %407 = vmatprep.subr.bf16.mxu0 0
    %408 = vmatpush1.bf16.msra.mxu0 %v391
    %409 = vmatprep.subr.bf16.mxu0 0
    %410 = vmatpush1.bf16.msra.mxu0 %v392
    %411 = vmatprep.subr.bf16.mxu0 0
    %412 = vmatpush1.bf16.msra.mxu0 %v393
    %413 = vmatprep.subr.bf16.mxu0 0
    %414 = vmatpush1.bf16.msra.mxu0 %v394
    %415 = vmatprep.subr.bf16.mxu0 0
    %416 = vmatpush1.bf16.msra.mxu0 %v395
    %417 = vmatprep.subr.bf16.mxu0 0
    %418 = vmatpush1.bf16.msra.mxu0 %v396
    %419 = vmatprep.subr.bf16.mxu0 0
    %420 = vmatpush1.bf16.msra.mxu0 %v397
    %421 = vmatprep.subr.bf16.mxu0 0
    %422 = vmatpush1.bf16.msra.mxu0 %v398
    %423 = vmatprep.subr.bf16.mxu0 0
    %424 = vmatpush1.bf16.msra.mxu0 0
    %425 = vmatprep.subr.bf16.mxu0 0
    %426 = vmatpush1.bf16.msra.mxu0 0
    %427 = vmatprep.subr.bf16.mxu0 0
    %428 = vmatpush1.bf16.msra.mxu0 0
    %429 = vmatprep.subr.bf16.mxu0 0
    %430 = vmatpush1.bf16.msra.mxu0 0
    %431 = vmatprep.subr.bf16.mxu0 0
    %432 = vmatpush1.bf16.msra.mxu0 0
    %433 = vmatprep.subr.bf16.mxu0 0
    %434 = vmatpush1.bf16.msra.mxu0 0
    %435 = vmatprep.subr.bf16.mxu0 0
    %436 = vmatpush1.bf16.msra.mxu0 0
    %437 = vmatprep.subr.bf16.mxu0 0
    %438 = vmatpush1.bf16.msra.mxu0 0
    %439 = vmatprep.mubr.bf16.mxu0 0
    %440 = vmatmul.mubr.bf16.gmra.mrb[0].mxu0 %v333
    %v441 = vpop.f32.mrb[0].mxu0
    %v442 = vadd.f32 %v357, %v441
    %v443 = vpop.f32.mrb[0].mxu0
    %v444 = vpop.f32.mrb[0].mxu0
    %v445 = vadd.f32 %v357, %v444
    %v446 = vpop.f32.mrb[0].mxu0
    %447 = vdwg.mxu0
    %v448 = vxor.u32 %v442, 2147483648
    %v449 = vxor.u32 %v445, 2147483648
    %v450 = vmul.f32 %v448, 1.442695
    %v451 = vpow.pop %v450
    %v452 = vmul.f32 %v449, 1.442695
    %v453 = vpow.pop %v452
    %v454 = vadd.f32 %v451, 1.0
    %v455 = vadd.f32 %v453, 1.0
    %v456 = vrcp.pop %v454
    %v457 = vmul.f32 1.0, %v456
    %v458 = vrcp.pop %v455
    %v459 = vmul.f32 1.0, %v458
    %v460 = vpack.c.bf16 %v459, %v457
    %v461 = vld [vmem:[#allocation8] sm:$0xf]
    %v462 = vld [vmem:[#allocation8 + $0x4] sm:$0xf]
    %v463 = vld [vmem:[#allocation8 + $0x8] sm:$0xf]
    %v464 = vld [vmem:[#allocation8 + $0xc] sm:$0xf]
    %v465 = vld [vmem:[#allocation8 + $0x10] sm:$0xf]
    %v466 = vld [vmem:[#allocation8 + $0x14] sm:$0xf]
    %v467 = vld [vmem:[#allocation8 + $0x18] sm:$0xf]
    %v468 = vld [vmem:[#allocation8 + $0x1c] sm:$0xf]
    %v469 = vld [vmem:[#allocation8 + $0x20] sm:$0xf]
    %v470 = vld [vmem:[#allocation8 + $0x24] sm:$0xf]
    %v471 = vld [vmem:[#allocation8 + $0x28] sm:$0xf]
    %v472 = vld [vmem:[#allocation8 + $0x2c] sm:$0xf]
    %v473 = vld [vmem:[#allocation8 + $0x30] sm:$0xf]
    %v474 = vld [vmem:[#allocation8 + $0x34] sm:$0xf]
    %v475 = vld [vmem:[#allocation8 + $0x38] sm:$0xf]
    %v476 = vld [vmem:[#allocation8 + $0x3c] sm:$0xf]
    %v477 = vld [vmem:[%s5] sm:$0x1]
    %v479 = vlaneseq
    %v480 = vshrl.u32 %v479, 7
    %v481 = vsub.s32 0, %v480
    %v482 = vrot.slane %v477, %v481
    %v500 = vunpack.c.l.b16 %v461
    %v501 = vunpack.c.l.b16 %v462
    %v502 = vunpack.c.l.b16 %v463
    %v503 = vunpack.c.l.b16 %v464
    %v504 = vunpack.c.l.b16 %v465
    %v505 = vunpack.c.l.b16 %v466
    %v506 = vunpack.c.l.b16 %v467
    %v507 = vunpack.c.l.b16 %v468
    %v508 = vunpack.c.l.b16 %v469
    %v509 = vunpack.c.l.b16 %v470
    %v510 = vunpack.c.l.b16 %v471
    %v511 = vunpack.c.l.b16 %v472
    %v512 = vunpack.c.l.b16 %v473
    %v513 = vunpack.c.l.b16 %v474
    %v514 = vunpack.c.l.b16 %v475
    %v515 = vunpack.c.l.b16 %v476
    %v516 = vpack.c.b16 %v501, %v500
    %v517 = vpack.c.b16 %v503, %v502
    %v518 = vpack.c.b16 %v505, %v504
    %v519 = vpack.c.b16 %v507, %v506
    %v520 = vpack.c.b16 %v509, %v508
    %v521 = vpack.c.b16 %v511, %v510
    %v522 = vpack.c.b16 %v513, %v512
    %v523 = vpack.c.b16 %v515, %v514
    %532 = vmatprep.subr.bf16.mxu0 0
    %533 = vmatpush1.bf16.msra.mxu0 %v516
    %534 = vmatprep.subr.bf16.mxu0 0
    %535 = vmatpush1.bf16.msra.mxu0 %v517
    %536 = vmatprep.subr.bf16.mxu0 0
    %537 = vmatpush1.bf16.msra.mxu0 %v518
    %538 = vmatprep.subr.bf16.mxu0 0
    %539 = vmatpush1.bf16.msra.mxu0 %v519
    %540 = vmatprep.subr.bf16.mxu0 0
    %541 = vmatpush1.bf16.msra.mxu0 %v520
    %542 = vmatprep.subr.bf16.mxu0 0
    %543 = vmatpush1.bf16.msra.mxu0 %v521
    %544 = vmatprep.subr.bf16.mxu0 0
    %545 = vmatpush1.bf16.msra.mxu0 %v522
    %546 = vmatprep.subr.bf16.mxu0 0
    %547 = vmatpush1.bf16.msra.mxu0 %v523
    %548 = vmatprep.subr.bf16.mxu0 0
    %549 = vmatpush1.bf16.msra.mxu0 0
    %550 = vmatprep.subr.bf16.mxu0 0
    %551 = vmatpush1.bf16.msra.mxu0 0
    %552 = vmatprep.subr.bf16.mxu0 0
    %553 = vmatpush1.bf16.msra.mxu0 0
    %554 = vmatprep.subr.bf16.mxu0 0
    %555 = vmatpush1.bf16.msra.mxu0 0
    %556 = vmatprep.subr.bf16.mxu0 0
    %557 = vmatpush1.bf16.msra.mxu0 0
    %558 = vmatprep.subr.bf16.mxu0 0
    %559 = vmatpush1.bf16.msra.mxu0 0
    %560 = vmatprep.subr.bf16.mxu0 0
    %561 = vmatpush1.bf16.msra.mxu0 0
    %562 = vmatprep.subr.bf16.mxu0 0
    %563 = vmatpush1.bf16.msra.mxu0 0
    %564 = vmatprep.mubr.bf16.mxu0 0
    %565 = vmatmul.mubr.bf16.gmra.mrb[0].mxu0 %v460
    %v566 = vpop.f32.mrb[0].mxu0
    %v567 = vadd.f32 %v482, %v566
    %v568 = vpop.f32.mrb[0].mxu0
    %v569 = vpop.f32.mrb[0].mxu0
    %v570 = vadd.f32 %v482, %v569
    %v571 = vpop.f32.mrb[0].mxu0
    %572 = vdwg.mxu0
    %573 = vst [vmem:[#allocation10] sm:$0xff] %v567
    %574 = vst [vmem:[#allocation10 + $0x8] sm:$0xff] %v570
    // Predicated region
    $region42: #{tpu_custom_call.1} parent=1 // pred_check
      _
    $region43: #{tpu_custom_call.1} parent=1 // pred_check_branch
      %576 = sbr.rel (0) target = $region45
    $region44: #{tpu_custom_call.1} parent=1 // pred_region
      %s578 = ssub.s32 256, 256
      %579 = vsyncadd [#allocation4], %s578
      %s580 = sshll.u32 [#allocation10], 4
      %s581 = int_to_ptr.vmem [resolvable:$true] %s580
      %586 = dma.vmem_to_hbm [thread:$0]  %s581, 256, %s6, [#allocation4], 128, 128, 8
    $region45: #{tpu_custom_call.1} parent=1 // pred_fallthru
      _
    // Predicated region
    $region46: #{tpu_custom_call.1} parent=1 // pred_check
      _
    $region47: #{tpu_custom_call.1} parent=1 // pred_check_branch
      %588 = sbr.rel (0) target = $region49
    $region48: #{tpu_custom_call.1} parent=1 // pred_region
      %589 = dma.done [#allocation4], 256
    $region49: #{tpu_custom_call.1} parent=1 // pred_fallthru
      _
    %590 = vsyncpa [#allocation3], 1
    %591 = vsyncpa [#allocation6], 1
    %592 = vsyncpa [#allocation9], 1
    %593 = vsyncpa [#allocation4], 1

</llo_original>
